<compile_context>
chip_gen: v7x
topology: tpu7x:2x2x1
jax: 0.10.0
libtpu: 0.0.40
codegen_flags: <defaults>
</compile_context>

<pallas_src>
import functools

import jax
import jax.numpy as jnp
from jax.experimental import pallas as pl
from jax.experimental.pallas import tpu as pltpu


def _cdiv(a, b):
    return -(-a // b)


def _round_up(x, m):
    return ((x + m - 1) // m) * m


@functools.lru_cache(maxsize=None)
def _tpu_defaults():
    """Best-effort chip query -> (vmem_capacity_bytes, tensorcores_per_chip)."""
    vmem_cap = 64 * 1024 * 1024          # conservative default (v7x per-TC VMEM)
    n_tc = 1                             # conservative default (v5e / v6e)
    try:
        info = pltpu.get_tpu_info()
        cap = getattr(info, "vmem_capacity_bytes", None)
        if isinstance(cap, int) and cap > 0:
            vmem_cap = cap
        for name in ("num_cores", "num_tensorcores", "tensorcore_count",
                     "cores_per_chip"):
            v = getattr(info, name, None)
            if isinstance(v, int) and v > 0:
                n_tc = v
                break
    except Exception:
        pass
    return vmem_cap, n_tc


def _lane_dense_2d(a, b):
    """Reshape an (out, tgt) pair into a lane-dense 2-D slab when possible.

    The loss is an elementwise squared error + total sum, so any identical
    contiguous reshape of both tensors is valid.  Only rewritten when the last
    dim is not already a multiple of 128 (the wasted-lane case)."""
    if a.ndim == 1:
        a = a.reshape(1, -1)
        b = b.reshape(1, -1)
    elif a.ndim != 2:
        a = a.reshape(a.shape[0], -1)
        b = b.reshape(b.shape[0], -1)
    n, m = a.shape
    if m % 128 != 0:
        total = n * m
        for w in (1024, 512, 256, 128):
            if total % w == 0:
                return a.reshape(total // w, w), b.reshape(total // w, w)
    return a, b


def _sse_kernel(rows, tile_n, chunk_rows, n_chunks, steps_per_core, n_blocks,
                total_logical, two_core, diff_native,
                o_ref, t_ref, sse_ref):
    """Partial sum of squared errors into an (8, W) accumulator per core."""
    if two_core:
        c = pl.program_id(0)
        i = pl.program_id(1)
        tile_idx = c * steps_per_core + i
        is_first = i == 0
    else:
        tile_idx = pl.program_id(0)
        is_first = tile_idx == 0

    @pl.when(is_first)
    def _():
        sse_ref[...] = jnp.zeros_like(sse_ref)

    def chunk_update(row0, masked):
        o = o_ref[pl.ds(row0, chunk_rows), :]
        t = t_ref[pl.ds(row0, chunk_rows), :]
        if diff_native:
            # bf16/f16: native-dtype subtract (bf16 VALU on v6e/v7x), single
            # upcast of the diff; saves one cast + one full-tile f32 temp.
            d = (o - t).astype(jnp.float32)
        else:
            d = o.astype(jnp.float32) - t.astype(jnp.float32)
        if masked:
            r = (tile_idx * tile_n + row0
                 + jax.lax.broadcasted_iota(jnp.int32, (chunk_rows, 1), 0))
            d = jnp.where(r < rows, d, 0.0)        # select before squaring
        sq = d * d
        # Fold (chunk_rows, W) -> (8, W): leading-axis split is layout-free,
        # the axis-0 sum is plain vector adds (VPU), no XLU reduce per step.
        sse_ref[...] += jnp.sum(sq.reshape(chunk_rows // 8, 8, -1), axis=0)

    def tile_update(masked):
        if n_chunks == 1:
            chunk_update(0, masked)
        else:
            @pl.loop(0, n_chunks)
            def _(j):
                chunk_update(pl.multiple_of(j * chunk_rows, chunk_rows), masked)

    n_full = rows // tile_n                     # blocks fully in-bounds (static)
    if n_full == total_logical:
        # Every logical block is a full block: unmasked fast path only.
        tile_update(False)
    else:
        if n_full > 0:
            @pl.when(tile_idx < n_full)
            def _():
                tile_update(False)              # unmasked fast path

        if n_full < n_blocks:
            @pl.when(jnp.logical_and(tile_idx >= n_full, tile_idx < n_blocks))
            def _():
                tile_update(True)               # masked tail tile
        # tile_idx >= n_blocks (redundant clamped tiles of the core split):
        # skip all VPU work; only the clamped DMA is unavoidable.


def _sse(out, tgt, *, tile_n=None, num_cores=None):
    """Sum of squared errors over all elements of (out - tgt), f32 scalar."""
    assert out.shape == tgt.shape
    out2, tgt2 = _lane_dense_2d(out, tgt)
    rows, w = out2.shape
    itemsize = max(out2.dtype.itemsize, tgt2.dtype.itemsize)

    vmem_cap, n_tc = _tpu_defaults()
    if num_cores is None:
        num_cores = n_tc

    # Generation-aware VMEM sizing (v7x: 64 MiB/TC, v5e/v6e: 128 MiB).
    budget = min(vmem_cap // 2, 40 * 1024 * 1024)
    vmem_limit = min((vmem_cap * 3) // 4, 96 * 1024 * 1024)

    # --- VMEM-aware batch tile -------------------------------------------
    # Per grid step: 2 tensors, double-buffered, plus ~3x f32 of temporaries.
    if tile_n is None:
        bytes_per_row = w * (4 * itemsize + 12)
        tile_n = budget // max(1, bytes_per_row)
    cap = max(8, (rows // 8) * 8)                 # don't exceed the batch
    tile_n = max(8, min(_round_up(int(tile_n), 8), cap, 32768))

    # Bounded in-kernel unroll: ~64 vregs (64 KiB f32) per fold chunk.
    chunk_rows = max(8, ((65536 // max(1, w)) // 8) * 8)
    if tile_n <= chunk_rows:
        chunk_rows = tile_n
    else:
        tile_n = (tile_n // chunk_rows) * chunk_rows
    n_chunks = tile_n // chunk_rows

    n_blocks = _cdiv(rows, tile_n)

    # 2-way TensorCore split only when the chip has >1 TC (v7x); otherwise a
    # plain 1-D grid with no clamp and no redundant tiles.
    nc = max(1, min(int(num_cores), n_blocks))
    while nc > 1 and (nc - 1) * _cdiv(n_blocks, nc) >= n_blocks:
        nc -= 1
    two_core = nc > 1

    if two_core:
        spc = _cdiv(n_blocks, nc)
        grid = (nc, spc)
        total_logical = nc * spc
        # Last core may own a few logical tiles past the end; clamp the DMA
        # (the kernel skips their compute entirely).
        in_map = lambda c, i: (jnp.minimum(c * spc + i, n_blocks - 1), 0)
        out_map = lambda c, i: (c, 0)
        out_rows = nc * 8
        # NOTE: "parallel" is the documented megacore sharding mechanism; if
        # profiling shows both cores serializing on one TC, switch this axis
        # to pltpu.CORE_PARALLEL or an explicit pl.core_map mesh.
        dims = ("parallel", "arbitrary")
    else:
        spc = n_blocks
        grid = (n_blocks,)
        total_logical = n_blocks
        in_map = lambda i: (i, 0)
        out_map = lambda i: (0, 0)
        out_rows = 8
        dims = ("arbitrary",)

    diff_native = (out2.dtype == tgt2.dtype
                   and out2.dtype.itemsize == 2
                   and jnp.issubdtype(out2.dtype, jnp.floating))

    kernel = functools.partial(
        _sse_kernel, rows, tile_n, chunk_rows, n_chunks, spc, n_blocks,
        total_logical, two_core, diff_native)

    sse_part = pl.pallas_call(
        kernel,
        out_shape=jax.ShapeDtypeStruct((out_rows, w), jnp.float32),
        grid_spec=pltpu.PrefetchScalarGridSpec(
            num_scalar_prefetch=0,
            grid=grid,
            in_specs=[
                pl.BlockSpec((tile_n, w), in_map),
                pl.BlockSpec((tile_n, w), in_map),
            ],
            out_specs=pl.BlockSpec((8, w), out_map),
        ),
        compiler_params=pltpu.CompilerParams(
            dimension_semantics=dims,
            vmem_limit_bytes=int(vmem_limit),
        ),
    )(out2, tgt2)

    # Tiny cross-lane reduce of the (8 * n_cores, W) partials in plain JAX.
    return jnp.sum(sse_part)


def liloss(outputs, targets, alpha, *, tile_n=None, num_cores=None):
    """Pallas implementation of LILoss.forward with Lp = Ld = MSE.

    outputs / targets : tuples (design, performance) of (N, M) arrays.
    Returns a scalar float32 loss.
    """
    out_d, out_p = outputs
    tgt_d, tgt_p = targets
    assert out_d.shape == tgt_d.shape and out_p.shape == tgt_p.shape
    assert out_d.shape[0] == out_p.shape[0], "batch dims must match"

    sse_p = _sse(out_p, tgt_p, tile_n=tile_n, num_cores=num_cores)
    sse_d = _sse(out_d, tgt_d, tile_n=tile_n, num_cores=num_cores)

    mse_p = sse_p * (1.0 / float(out_p.size))
    mse_d = sse_d * (1.0 / float(out_d.size))
    return mse_p + jnp.float32(alpha) * mse_d


def liloss_ref(outputs, targets, alpha):
    """Pure-JAX reference (MSE for both Lp and Ld, f32 math)."""
    out_d, out_p = outputs
    tgt_d, tgt_p = targets
    mse_p = jnp.mean((out_p.astype(jnp.float32) - tgt_p.astype(jnp.float32)) ** 2)
    mse_d = jnp.mean((out_d.astype(jnp.float32) - tgt_d.astype(jnp.float32)) ** 2)
    return mse_p + alpha * mse_d


if __name__ == "__main__":
    key = jax.random.PRNGKey(0)

    # ---- test 1: small f32 problem, auto tile, single grid step --------------
    k1, k2, k3, k4, key = jax.random.split(key, 5)
    N, M_DESIGN, M_PERF, ALPHA = 16, 128, 256, 0.5
    outputs = (jax.random.normal(k1, (N, M_DESIGN), dtype=jnp.float32),
               jax.random.normal(k3, (N, M_PERF), dtype=jnp.float32))
    targets = (jax.random.normal(k2, (N, M_DESIGN), dtype=jnp.float32),
               jax.random.normal(k4, (N, M_PERF), dtype=jnp.float32))

    loss = liloss(outputs, targets, ALPHA)
    jax.block_until_ready(loss)
    ref = liloss_ref(outputs, targets, ALPHA)
    assert jnp.allclose(loss, ref, rtol=1e-5, atol=1e-5), (loss, ref)

    # ---- test 2: odd batch, bf16, forced small tile, forced 2-core split -----
    k1, k2, k3, k4, key = jax.random.split(key, 5)
    N2, ALPHA2 = 37, 1.7
    outputs2 = (jax.random.normal(k1, (N2, M_DESIGN), dtype=jnp.bfloat16),
                jax.random.normal(k3, (N2, M_PERF), dtype=jnp.bfloat16))
    targets2 = (jax.random.normal(k2, (N2, M_DESIGN), dtype=jnp.bfloat16),
                jax.random.normal(k4, (N2, M_PERF), dtype=jnp.bfloat16))

    loss2 = liloss(outputs2, targets2, ALPHA2, tile_n=16, num_cores=2)
    jax.block_until_ready(loss2)
    ref2 = liloss_ref(outputs2, targets2, ALPHA2)
    # bf16 native-diff path vs f32 reference -> looser tolerance.
    assert jnp.allclose(loss2, ref2, rtol=2e-2, atol=2e-2), (loss2, ref2)

    # ---- test 3: non-128 feature dims (lane-dense reshape + fallback path) ---
    k1, k2, k3, k4, key = jax.random.split(key, 5)
    N3, MD3, MP3, ALPHA3 = 24, 96, 100, 0.25
    outputs3 = (jax.random.normal(k1, (N3, MD3), dtype=jnp.float32),
                jax.random.normal(k3, (N3, MP3), dtype=jnp.float32))
    targets3 = (jax.random.normal(k2, (N3, MD3), dtype=jnp.float32),
                jax.random.normal(k4, (N3, MP3), dtype=jnp.float32))

    loss3 = liloss(outputs3, targets3, ALPHA3)
    jax.block_until_ready(loss3)
    ref3 = liloss_ref(outputs3, targets3, ALPHA3)
    assert jnp.allclose(loss3, ref3, rtol=1e-5, atol=1e-5), (loss3, ref3)

    print("KERNEL_OK")
</pallas_src>

<mosaic_0001>
module attributes {stable_mosaic.version = 11 : i64} {
  func.func @_sse_kernel(%arg0: i32, %arg1: memref<16x256xf32, #tpu.memory_space<vmem>>, %arg2: memref<16x256xf32, #tpu.memory_space<vmem>>, %arg3: memref<8x256xf32, #tpu.memory_space<vmem>>) attributes {dimension_semantics = [#tpu.dimension_semantics<arbitrary>], iteration_bounds = array<i64: 1>, scalar_prefetch = 0 : i64, scratch_operands = 0 : i64, tpu.core_type = #tpu.core_type<tc>, window_params = [{transform_indices = @transform_0, window_bounds = array<i64: 16, 256>}, {transform_indices = @transform_1, window_bounds = array<i64: 16, 256>}, {pipeline_mode = #tpu.pipeline_mode<synchronous>, transform_indices = @transform_2, window_bounds = array<i64: 8, 256>}]} {
    %c0_i32 = arith.constant 0 : i32
    %0 = arith.cmpi eq, %arg0, %c0_i32 : i32
    %1 = arith.extui %0 : i1 to i32
    %c0_i32_0 = arith.constant 0 : i32
    %2 = arith.cmpi ne, %1, %c0_i32_0 : i32
    scf.if %2 {
      %cst_8 = arith.constant 0.000000e+00 : f32
      %12 = vector.broadcast %cst_8 : f32 to vector<8x256xf32>
      %c0_9 = arith.constant 0 : index
      %c0_10 = arith.constant 0 : index
      %13 = vector.load %arg3[%c0_9, %c0_10] : memref<8x256xf32, #tpu.memory_space<vmem>>, vector<8x256xf32>
      tpu.vector_store %arg3[%c0_9, %c0_10], %12 {strides = array<i32>} : memref<8x256xf32, #tpu.memory_space<vmem>>, vector<8x256xf32>,
    } else {
    }
    %c0 = arith.constant 0 : index
    %c0_1 = arith.constant 0 : index
    %3 = vector.load %arg1[%c0, %c0_1] : memref<16x256xf32, #tpu.memory_space<vmem>>, vector<16x256xf32>
    %c0_2 = arith.constant 0 : index
    %c0_3 = arith.constant 0 : index
    %4 = vector.load %arg2[%c0_2, %c0_3] : memref<16x256xf32, #tpu.memory_space<vmem>>, vector<16x256xf32>
    %5 = arith.subf %3, %4 : vector<16x256xf32>
    %6 = arith.mulf %5, %5 : vector<16x256xf32>
    %c0_4 = arith.constant 0 : index
    %c0_5 = arith.constant 0 : index
    %7 = vector.load %arg3[%c0_4, %c0_5] : memref<8x256xf32, #tpu.memory_space<vmem>>, vector<8x256xf32>
    %8 = vector.shape_cast %6 : vector<16x256xf32> to vector<2x8x256xf32>
    %cst = arith.constant dense<0.000000e+00> : vector<8x256xf32>
    %9 = vector.multi_reduction <add>, %8, %cst [0] : vector<2x8x256xf32> to vector<8x256xf32>
    %10 = arith.addf %7, %9 : vector<8x256xf32>
    %c0_6 = arith.constant 0 : index
    %c0_7 = arith.constant 0 : index
    %11 = vector.load %arg3[%c0_6, %c0_7] : memref<8x256xf32, #tpu.memory_space<vmem>>, vector<8x256xf32>
    tpu.vector_store %arg3[%c0_6, %c0_7], %10 {strides = array<i32>} : memref<8x256xf32, #tpu.memory_space<vmem>>, vector<8x256xf32>,
    return
  }
  func.func @transform_0(%arg0: i32) -> (i32, i32) {
    %c0_i32 = arith.constant 0 : i32
    %c0_i32_0 = arith.constant 0 : i32
    return %arg0, %c0_i32 : i32, i32
  }
  func.func @transform_1(%arg0: i32) -> (i32, i32) {
    %c0_i32 = arith.constant 0 : i32
    %c0_i32_0 = arith.constant 0 : i32
    return %arg0, %c0_i32 : i32, i32
  }
  func.func @transform_2(%arg0: i32) -> (i32, i32) {
    %c0_i32 = arith.constant 0 : i32
    %c0_i32_0 = arith.constant 0 : i32
    %c0_i32_1 = arith.constant 0 : i32
    return %c0_i32, %c0_i32_0 : i32, i32
  }
}

</mosaic_0001>

<llo_original>
// kernel: tpu_custom_call.1
$region0: #{tpu_custom_call.1}
  #allocation0 [shape = 'u32[]', space=smem, size = 0x4, offset = 0x4, fixed_abs, tag = 'smem constant byte address 0x4 - core index']
  #allocation1 [shape = 'u32[144,128]{1,0:T(1,128)}', space=vmem, size = 0x12000, scoped, tag = 'internal scratch']
  %s0 = inlined_call_operand.hbm [shape: f32[16,256], index: 0, kind: input, shape index: {}]
  %s1 = inlined_call_operand.hbm [shape: f32[16,256], index: 1, kind: input, shape index: {}]
  %s2 = inlined_call_operand.hbm [shape: f32[8,256], index: 2, kind: output, shape index: {}]
  %s3 = sld [smem:[#allocation0]]
  $region30: #{tpu_custom_call.1} parent=0
    _
  %s5 = ssub.s32 1, %s3
  %s6 = scalar_select 0, %s5, %s3
  $region1: #{tpu_custom_call.1} parent=0
    #allocation2 [shape = 'u8[16384]{0}', space=vmem, size = 0x4000, scoped, tag = 'input window, operand 0, single buffered']
    #allocation3 [shape = 's32[1]{0}', space=sflag, size = 0x4, scoped, tag = 'scoped memory for tpu_custom_call.1']
    #allocation4 [shape = 's32[1]{0}', space=sflag, size = 0x4, scoped, tag = 'scoped memory for tpu_custom_call.1']
    #allocation5 [shape = 'u8[16384]{0}', space=vmem, size = 0x4000, scoped, tag = 'input window, operand 1, single buffered']
    #allocation6 [shape = 's32[1]{0}', space=sflag, size = 0x4, scoped, tag = 'scoped memory for tpu_custom_call.1']
    #allocation7 [shape = 'u8[8192]{0}', space=vmem, size = 0x2000, scoped, tag = 'output window, operand 0, single buffered']
    %7 = vsyncpa [#allocation3], 0
    %8 = vsyncpa [#allocation6], 0
    %9 = vsyncpa [#allocation4], 0
    // Predicated region
    $region2: #{tpu_custom_call.1} parent=1 // pred_check
      _
    $region3: #{tpu_custom_call.1} parent=1 // pred_check_branch
      %11 = sbr.rel (0) target = $region5
    $region4: #{tpu_custom_call.1} parent=1 // pred_region
      %s13 = ssub.s32 512, 512
      %14 = vsyncadd [#allocation3], %s13
      %s15 = sshll.u32 [#allocation2], 4
      %s16 = int_to_ptr.vmem [resolvable:$true] %s15
      %21 = dma.hbm_to_vmem [thread:$0]  %s0, 512, %s16, [#allocation3], 256, 256, 16
    $region5: #{tpu_custom_call.1} parent=1 // pred_fallthru
      _
    // Predicated region
    $region6: #{tpu_custom_call.1} parent=1 // pred_check
      _
    $region7: #{tpu_custom_call.1} parent=1 // pred_check_branch
      %23 = sbr.rel (0) target = $region9
    $region8: #{tpu_custom_call.1} parent=1 // pred_region
      %s25 = ssub.s32 512, 512
      %26 = vsyncadd [#allocation6], %s25
      %s27 = sshll.u32 [#allocation5], 4
      %s28 = int_to_ptr.vmem [resolvable:$true] %s27
      %33 = dma.hbm_to_vmem [thread:$0]  %s1, 512, %s28, [#allocation6], 256, 256, 16
    $region9: #{tpu_custom_call.1} parent=1 // pred_fallthru
      _
    // Predicated region
    $region10: #{tpu_custom_call.1} parent=1 // pred_check
      _
    $region11: #{tpu_custom_call.1} parent=1 // pred_check_branch
      %35 = sbr.rel (0) target = $region13
    $region12: #{tpu_custom_call.1} parent=1 // pred_region
      %36 = dma.done [#allocation3], 512
    $region13: #{tpu_custom_call.1} parent=1 // pred_fallthru
      _
    // Predicated region
    $region14: #{tpu_custom_call.1} parent=1 // pred_check
      _
    $region15: #{tpu_custom_call.1} parent=1 // pred_check_branch
      %38 = sbr.rel (0) target = $region17
    $region16: #{tpu_custom_call.1} parent=1 // pred_region
      %39 = dma.done [#allocation6], 512
    $region17: #{tpu_custom_call.1} parent=1 // pred_fallthru
      _
    %p40 = scmp.eq.s32.totalorder 0, 0
    // Predicated region
    $region18: #{tpu_custom_call.1} parent=1 // pred_check
      %p41 = pneg %p40
    $region19: #{tpu_custom_call.1} parent=1 // pred_check_branch
      %43 = sbr.rel (%p41) target = $region21
    $region20: #{tpu_custom_call.1} parent=1 // pred_region
      %44 = vst [vmem:[#allocation7] sm:$0xff] 0.0
      %45 = vst [vmem:[#allocation7 + $0x8] sm:$0xff] 0.0
    $region21: #{tpu_custom_call.1} parent=1 // pred_fallthru
      _
    %v46 = vld [vmem:[#allocation2] sm:$0xff]
    %v47 = vld [vmem:[#allocation2 + $0x8] sm:$0xff]
    %v48 = vld [vmem:[#allocation2 + $0x10] sm:$0xff]
    %v49 = vld [vmem:[#allocation2 + $0x18] sm:$0xff]
    %v50 = vld [vmem:[#allocation5] sm:$0xff]
    %v51 = vld [vmem:[#allocation5 + $0x8] sm:$0xff]
    %v52 = vld [vmem:[#allocation5 + $0x10] sm:$0xff]
    %v53 = vld [vmem:[#allocation5 + $0x18] sm:$0xff]
    %v54 = vsub.f32 %v46, %v50
    %v55 = vsub.f32 %v47, %v51
    %v56 = vsub.f32 %v48, %v52
    %v57 = vsub.f32 %v49, %v53
    %v58 = vmul.f32 %v54, %v54
    %v59 = vmul.f32 %v55, %v55
    %v60 = vmul.f32 %v56, %v56
    %v61 = vmul.f32 %v57, %v57
    %v62 = vld [vmem:[#allocation7] sm:$0xff]
    %v63 = vld [vmem:[#allocation7 + $0x8] sm:$0xff]
    %v64 = vadd.f32 %v58, %v60
    %v65 = vadd.f32 %v59, %v61
    %v66 = vadd.f32 %v62, %v64
    %v67 = vadd.f32 %v63, %v65
    %68 = vst [vmem:[#allocation7] sm:$0xff] %v66
    %69 = vst [vmem:[#allocation7 + $0x8] sm:$0xff] %v67
    // Predicated region
    $region22: #{tpu_custom_call.1} parent=1 // pred_check
      _
    $region23: #{tpu_custom_call.1} parent=1 // pred_check_branch
      %71 = sbr.rel (0) target = $region25
    $region24: #{tpu_custom_call.1} parent=1 // pred_region
      %s73 = ssub.s32 256, 256
      %74 = vsyncadd [#allocation4], %s73
      %s76 = sshll.u32 [#allocation7], 4
      %s77 = int_to_ptr.vmem [resolvable:$true] %s76
      %79 = dma.vmem_to_hbm [thread:$0]  %s77, 256, %s2, [#allocation4]
    $region25: #{tpu_custom_call.1} parent=1 // pred_fallthru
      _
    // Predicated region
    $region26: #{tpu_custom_call.1} parent=1 // pred_check
      _
    $region27: #{tpu_custom_call.1} parent=1 // pred_check_branch
      %81 = sbr.rel (0) target = $region29
    $region28: #{tpu_custom_call.1} parent=1 // pred_region
      %82 = dma.done [#allocation4], 256
    $region29: #{tpu_custom_call.1} parent=1 // pred_fallthru
      _
    %83 = vsyncpa [#allocation3], 1
    %84 = vsyncpa [#allocation6], 1
    %85 = vsyncpa [#allocation4], 1

</llo_original>
